<compile_context>
chip_gen: v6e
topology: v6e:2x2x1
jax: 0.10.0
libtpu: 0.0.40
codegen_flags: <defaults>
</compile_context>

<pallas_src>
import jax
import jax.numpy as jnp
from jax.experimental import pallas as pl
from jax.experimental.pallas import tpu as pltpu

# bf16 operands for the recurrent MXU dot (critical path).  Set to jnp.float32
# for an exact-f32 recurrence (tighter tolerance / v5e-conservative numerics).
_RECURRENT_DOT_DTYPE = jnp.bfloat16


def _vanilla_rnn_kernel(x_ref, wih_ref, whh_ref, b_ref,
                        fc1w_ref, fc1b_ref, fcw_ref, fcb_ref,
                        out_ref, hid_ref):
    TB = x_ref.shape[0]                 # T*B rows, t-major (row t*B + b)
    B, H = hid_ref.shape
    T = TB // B

    # --- off-critical-path: batched input projection, computed once -----------
    # xproj[t*B + b, :] = x_t[b] @ W_ih^T + (b_ih + b_hh)
    xproj = (jnp.dot(x_ref[...], wih_ref[...],
                     preferred_element_type=jnp.float32)
             + b_ref[...])                                     # (T*B, H) f32
    # Hoist the loop-invariant per-step slices out of the recurrence.
    xproj_t = [xproj[t * B:(t + 1) * B, :] for t in range(T)]  # T x (B, H)

    whh = whh_ref[...]                                         # (H, H) bf16

    # --- serial recurrence: only {cast -> MXU dot -> add -> tanh} per step ----
    h = jnp.zeros((B, H), jnp.float32)
    hs_list = []
    for t in range(T):                                         # static unroll (T=8)
        h = jnp.tanh(
            xproj_t[t]
            + jnp.dot(h.astype(whh.dtype), whh,
                      preferred_element_type=jnp.float32))
        hs_list.append(h)                                      # stays in vregs
    hid_ref[...] = h                                           # final hidden h_T

    # --- MLP head, hoisted: one batched (T*B, H) matmul + VPU/XLU fc ----------
    hs = jnp.concatenate(hs_list, axis=0)                      # (T*B, H), t-major
    r = jnp.maximum(hs, 0.0)
    z = jnp.maximum(
        jnp.dot(r, fc1w_ref[...], preferred_element_type=jnp.float32)
        + fc1b_ref[...],
        0.0)
    # fc has a single output feature -> multiply + lane reduce (skip the MXU).
    y = jnp.sum(z * fcw_ref[...], axis=-1, keepdims=True) + fcb_ref[...]
    out_ref[...] = jax.nn.sigmoid(y)                           # (T*B, 1), one store


@jax.jit
def vanilla_rnn_forward(x, params):
    """x: (B, T, I) float32, batch_first like the PyTorch module.

    Returns (out, hidden) with out (B*T, 1), hidden (1, B, H)."""
    B, T, I = x.shape
    H = params["w_hh"].shape[0]

    # t-major flattened input: row index t*B + b.
    x_flat = jnp.transpose(x, (1, 0, 2)).reshape(T * B, I)     # (T*B, I)

    # Pre-transpose weights so the kernel computes x @ W; pre-sum RNN biases.
    wih = params["w_ih"].T                                     # (I, H) f32
    whh = params["w_hh"].T.astype(_RECURRENT_DOT_DTYPE)        # (H, H) bf16
    b = (params["b_ih"] + params["b_hh"])[None, :]             # (1, H)
    fc1w = params["fc1_w"].T                                   # (H, H)
    fc1b = params["fc1_b"][None, :]                            # (1, H)
    fcw = params["fc_w"]                                       # (1, H) row vector
    fcb = params["fc_b"][None, :]                              # (1, 1)

    vmem_specs = [pl.BlockSpec(memory_space=pltpu.MemorySpace.VMEM)
                  for _ in range(8)]

    out_flat, h_final = pl.pallas_call(
        _vanilla_rnn_kernel,
        out_shape=(
            jax.ShapeDtypeStruct((T * B, 1), jnp.float32),     # head output, t-major
            jax.ShapeDtypeStruct((B, H), jnp.float32),         # final hidden
        ),
        in_specs=vmem_specs,
        out_specs=(pl.BlockSpec(memory_space=pltpu.MemorySpace.VMEM),
                   pl.BlockSpec(memory_space=pltpu.MemorySpace.VMEM)),
        compiler_params=pltpu.CompilerParams(
            vmem_limit_bytes=32 * 1024 * 1024),
    )(x_flat, wih, whh, b, fc1w, fc1b, fcw, fcb)

    # Kernel rows are t-major (t*B + b); PyTorch's out.view(-1, H) flattens
    # (B, T, ...) row-major -> index b*T + t.  Reorder 16 floats in the wrapper.
    out = out_flat.reshape(T, B).transpose(1, 0).reshape(B * T, 1)
    hidden = h_final[None]                                     # (n_layers=1, B, H)
    return out, hidden


def _reference_forward(x, params):
    """Pure-JAX f32 reference of the same forward pass (for validation)."""
    B, T, I = x.shape
    H = params["w_hh"].shape[0]

    def cell(h, x_t):
        h_new = jnp.tanh(x_t @ params["w_ih"].T + params["b_ih"]
                         + h @ params["w_hh"].T + params["b_hh"])
        return h_new, h_new

    h0 = jnp.zeros((B, H), jnp.float32)
    hT, hs = jax.lax.scan(cell, h0, jnp.transpose(x, (1, 0, 2)))   # hs: (T, B, H)
    outs = jnp.transpose(hs, (1, 0, 2)).reshape(B * T, H)
    r = jnp.maximum(outs, 0.0)
    z = jnp.maximum(r @ params["fc1_w"].T + params["fc1_b"], 0.0)
    y = jax.nn.sigmoid(z @ params["fc_w"].T + params["fc_b"])
    return y, hT[None]


def _init_params(key, input_size, hidden_dim):
    """Deterministic init mirroring PyTorch's U(-1/sqrt(H), 1/sqrt(H))."""
    k = 1.0 / jnp.sqrt(jnp.float32(hidden_dim))
    keys = jax.random.split(key, 8)
    u = lambda kk, shape: jax.random.uniform(kk, shape, jnp.float32, -k, k)
    return {
        "w_ih": u(keys[0], (hidden_dim, input_size)),
        "w_hh": u(keys[1], (hidden_dim, hidden_dim)),
        "b_ih": u(keys[2], (hidden_dim,)),
        "b_hh": u(keys[3], (hidden_dim,)),
        "fc1_w": u(keys[4], (hidden_dim, hidden_dim)),
        "fc1_b": u(keys[5], (hidden_dim,)),
        "fc_w": u(keys[6], (1, hidden_dim)),
        "fc_b": u(keys[7], (1,)),
    }


if __name__ == "__main__":
    B, T, I, H = 2, 8, 6, 64

    key = jax.random.PRNGKey(0)
    kx, kp = jax.random.split(key)
    x = jax.random.normal(kx, (B, T, I), jnp.float32)
    params = _init_params(kp, I, H)

    out, hidden = vanilla_rnn_forward(x, params)
    out = jax.block_until_ready(out)
    hidden = jax.block_until_ready(hidden)

    assert out.shape == (B * T, 1), out.shape
    assert hidden.shape == (1, B, H), hidden.shape

    ref_out, ref_hidden = _reference_forward(x, params)
    # Tolerance relaxed (from 1e-5) because the recurrent matmul operands are
    # bf16; everything else (bias add, tanh, head) is exact f32.
    assert jnp.allclose(out, ref_out, atol=2e-2, rtol=1e-2)
    assert jnp.allclose(hidden, ref_hidden, atol=2e-2, rtol=1e-2)

    print("KERNEL_OK")
</pallas_src>

<mosaic_0001>
module attributes {stable_mosaic.version = 11 : i64} {
  func.func @_vanilla_rnn_kernel(%arg0: memref<16x6xf32, #tpu.memory_space<vmem>>, %arg1: memref<6x64xf32, #tpu.memory_space<vmem>>, %arg2: memref<64x64xbf16, #tpu.memory_space<vmem>>, %arg3: memref<1x64xf32, #tpu.memory_space<vmem>>, %arg4: memref<64x64xf32, #tpu.memory_space<vmem>>, %arg5: memref<1x64xf32, #tpu.memory_space<vmem>>, %arg6: memref<1x64xf32, #tpu.memory_space<vmem>>, %arg7: memref<1x1xf32, #tpu.memory_space<vmem>>, %arg8: memref<16x1xf32, #tpu.memory_space<vmem>>, %arg9: memref<2x64xf32, #tpu.memory_space<vmem>>) attributes {dimension_semantics = [], scalar_prefetch = 0 : i64, scratch_operands = 0 : i64, tpu.core_type = #tpu.core_type<tc>} {
    %c0 = arith.constant 0 : index
    %c0_0 = arith.constant 0 : index
    %0 = vector.load %arg0[%c0, %c0_0] : memref<16x6xf32, #tpu.memory_space<vmem>>, vector<16x6xf32>
    %c0_1 = arith.constant 0 : index
    %c0_2 = arith.constant 0 : index
    %1 = vector.load %arg1[%c0_1, %c0_2] : memref<6x64xf32, #tpu.memory_space<vmem>>, vector<6x64xf32>
    %cst = arith.constant dense<0.000000e+00> : vector<16x64xf32>
    %2 = tpu.matmul %0, %1, %cst {dimension_numbers = #tpu.dot_dimension_numbers<[1], [0], [0], [1], [0, 0, 1, 1], [], []>} : vector<16x6xf32>, vector<6x64xf32>, vector<16x64xf32> -> vector<16x64xf32>
    %c0_3 = arith.constant 0 : index
    %c0_4 = arith.constant 0 : index
    %3 = vector.load %arg3[%c0_3, %c0_4] : memref<1x64xf32, #tpu.memory_space<vmem>>, vector<1x64xf32>
    %4 = vector.broadcast %3 : vector<1x64xf32> to vector<16x64xf32>
    %5 = arith.addf %2, %4 : vector<16x64xf32>
    %6 = vector.extract_strided_slice %5 {offsets = [0, 0], sizes = [2, 64], strides = [1, 1]} : vector<16x64xf32> to vector<2x64xf32>
    %7 = vector.extract_strided_slice %5 {offsets = [2, 0], sizes = [2, 64], strides = [1, 1]} : vector<16x64xf32> to vector<2x64xf32>
    %8 = vector.extract_strided_slice %5 {offsets = [4, 0], sizes = [2, 64], strides = [1, 1]} : vector<16x64xf32> to vector<2x64xf32>
    %9 = vector.extract_strided_slice %5 {offsets = [6, 0], sizes = [2, 64], strides = [1, 1]} : vector<16x64xf32> to vector<2x64xf32>
    %10 = vector.extract_strided_slice %5 {offsets = [8, 0], sizes = [2, 64], strides = [1, 1]} : vector<16x64xf32> to vector<2x64xf32>
    %11 = vector.extract_strided_slice %5 {offsets = [10, 0], sizes = [2, 64], strides = [1, 1]} : vector<16x64xf32> to vector<2x64xf32>
    %12 = vector.extract_strided_slice %5 {offsets = [12, 0], sizes = [2, 64], strides = [1, 1]} : vector<16x64xf32> to vector<2x64xf32>
    %13 = vector.extract_strided_slice %5 {offsets = [14, 0], sizes = [2, 64], strides = [1, 1]} : vector<16x64xf32> to vector<2x64xf32>
    %c0_5 = arith.constant 0 : index
    %c0_6 = arith.constant 0 : index
    %14 = vector.load %arg2[%c0_5, %c0_6] : memref<64x64xbf16, #tpu.memory_space<vmem>>, vector<64x64xbf16>
    %cst_7 = arith.constant 0.000000e+00 : f32
    %15 = vector.broadcast %cst_7 : f32 to vector<2x64xf32>
    %16 = arith.truncf %15 : vector<2x64xf32> to vector<2x64xbf16>
    %cst_8 = arith.constant dense<0.000000e+00> : vector<2x64xf32>
    %17 = tpu.matmul %16, %14, %cst_8 {dimension_numbers = #tpu.dot_dimension_numbers<[1], [0], [0], [1], [0, 0, 1, 1], [], []>} : vector<2x64xbf16>, vector<64x64xbf16>, vector<2x64xf32> -> vector<2x64xf32>
    %18 = arith.addf %6, %17 : vector<2x64xf32>
    %19 = math.tanh %18 : vector<2x64xf32>
    %20 = arith.truncf %19 : vector<2x64xf32> to vector<2x64xbf16>
    %cst_9 = arith.constant dense<0.000000e+00> : vector<2x64xf32>
    %21 = tpu.matmul %20, %14, %cst_9 {dimension_numbers = #tpu.dot_dimension_numbers<[1], [0], [0], [1], [0, 0, 1, 1], [], []>} : vector<2x64xbf16>, vector<64x64xbf16>, vector<2x64xf32> -> vector<2x64xf32>
    %22 = arith.addf %7, %21 : vector<2x64xf32>
    %23 = math.tanh %22 : vector<2x64xf32>
    %24 = arith.truncf %23 : vector<2x64xf32> to vector<2x64xbf16>
    %cst_10 = arith.constant dense<0.000000e+00> : vector<2x64xf32>
    %25 = tpu.matmul %24, %14, %cst_10 {dimension_numbers = #tpu.dot_dimension_numbers<[1], [0], [0], [1], [0, 0, 1, 1], [], []>} : vector<2x64xbf16>, vector<64x64xbf16>, vector<2x64xf32> -> vector<2x64xf32>
    %26 = arith.addf %8, %25 : vector<2x64xf32>
    %27 = math.tanh %26 : vector<2x64xf32>
    %28 = arith.truncf %27 : vector<2x64xf32> to vector<2x64xbf16>
    %cst_11 = arith.constant dense<0.000000e+00> : vector<2x64xf32>
    %29 = tpu.matmul %28, %14, %cst_11 {dimension_numbers = #tpu.dot_dimension_numbers<[1], [0], [0], [1], [0, 0, 1, 1], [], []>} : vector<2x64xbf16>, vector<64x64xbf16>, vector<2x64xf32> -> vector<2x64xf32>
    %30 = arith.addf %9, %29 : vector<2x64xf32>
    %31 = math.tanh %30 : vector<2x64xf32>
    %32 = arith.truncf %31 : vector<2x64xf32> to vector<2x64xbf16>
    %cst_12 = arith.constant dense<0.000000e+00> : vector<2x64xf32>
    %33 = tpu.matmul %32, %14, %cst_12 {dimension_numbers = #tpu.dot_dimension_numbers<[1], [0], [0], [1], [0, 0, 1, 1], [], []>} : vector<2x64xbf16>, vector<64x64xbf16>, vector<2x64xf32> -> vector<2x64xf32>
    %34 = arith.addf %10, %33 : vector<2x64xf32>
    %35 = math.tanh %34 : vector<2x64xf32>
    %36 = arith.truncf %35 : vector<2x64xf32> to vector<2x64xbf16>
    %cst_13 = arith.constant dense<0.000000e+00> : vector<2x64xf32>
    %37 = tpu.matmul %36, %14, %cst_13 {dimension_numbers = #tpu.dot_dimension_numbers<[1], [0], [0], [1], [0, 0, 1, 1], [], []>} : vector<2x64xbf16>, vector<64x64xbf16>, vector<2x64xf32> -> vector<2x64xf32>
    %38 = arith.addf %11, %37 : vector<2x64xf32>
    %39 = math.tanh %38 : vector<2x64xf32>
    %40 = arith.truncf %39 : vector<2x64xf32> to vector<2x64xbf16>
    %cst_14 = arith.constant dense<0.000000e+00> : vector<2x64xf32>
    %41 = tpu.matmul %40, %14, %cst_14 {dimension_numbers = #tpu.dot_dimension_numbers<[1], [0], [0], [1], [0, 0, 1, 1], [], []>} : vector<2x64xbf16>, vector<64x64xbf16>, vector<2x64xf32> -> vector<2x64xf32>
    %42 = arith.addf %12, %41 : vector<2x64xf32>
    %43 = math.tanh %42 : vector<2x64xf32>
    %44 = arith.truncf %43 : vector<2x64xf32> to vector<2x64xbf16>
    %cst_15 = arith.constant dense<0.000000e+00> : vector<2x64xf32>
    %45 = tpu.matmul %44, %14, %cst_15 {dimension_numbers = #tpu.dot_dimension_numbers<[1], [0], [0], [1], [0, 0, 1, 1], [], []>} : vector<2x64xbf16>, vector<64x64xbf16>, vector<2x64xf32> -> vector<2x64xf32>
    %46 = arith.addf %13, %45 : vector<2x64xf32>
    %47 = math.tanh %46 : vector<2x64xf32>
    %c0_16 = arith.constant 0 : index
    %c0_17 = arith.constant 0 : index
    %48 = vector.load %arg9[%c0_16, %c0_17] : memref<2x64xf32, #tpu.memory_space<vmem>>, vector<2x64xf32>
    tpu.vector_store %arg9[%c0_16, %c0_17], %47 {strides = array<i32>} : memref<2x64xf32, #tpu.memory_space<vmem>>, vector<2x64xf32>,
    %49 = tpu.concatenate %19, %23, %27, %31, %35, %39, %43, %47 in 0 : vector<2x64xf32>, vector<2x64xf32>, vector<2x64xf32>, vector<2x64xf32>, vector<2x64xf32>, vector<2x64xf32>, vector<2x64xf32>, vector<2x64xf32> -> vector<16x64xf32>
    %cst_18 = arith.constant 0.000000e+00 : f32
    %50 = vector.broadcast %cst_18 : f32 to vector<16x64xf32>
    %51 = arith.maximumf %49, %50 : vector<16x64xf32>
    %c0_19 = arith.constant 0 : index
    %c0_20 = arith.constant 0 : index
    %52 = vector.load %arg4[%c0_19, %c0_20] : memref<64x64xf32, #tpu.memory_space<vmem>>, vector<64x64xf32>
    %cst_21 = arith.constant dense<0.000000e+00> : vector<16x64xf32>
    %53 = tpu.matmul %51, %52, %cst_21 {dimension_numbers = #tpu.dot_dimension_numbers<[1], [0], [0], [1], [0, 0, 1, 1], [], []>} : vector<16x64xf32>, vector<64x64xf32>, vector<16x64xf32> -> vector<16x64xf32>
    %c0_22 = arith.constant 0 : index
    %c0_23 = arith.constant 0 : index
    %54 = vector.load %arg5[%c0_22, %c0_23] : memref<1x64xf32, #tpu.memory_space<vmem>>, vector<1x64xf32>
    %55 = vector.broadcast %54 : vector<1x64xf32> to vector<16x64xf32>
    %56 = arith.addf %53, %55 : vector<16x64xf32>
    %cst_24 = arith.constant 0.000000e+00 : f32
    %57 = vector.broadcast %cst_24 : f32 to vector<16x64xf32>
    %58 = arith.maximumf %56, %57 : vector<16x64xf32>
    %c0_25 = arith.constant 0 : index
    %c0_26 = arith.constant 0 : index
    %59 = vector.load %arg6[%c0_25, %c0_26] : memref<1x64xf32, #tpu.memory_space<vmem>>, vector<1x64xf32>
    %60 = vector.broadcast %59 : vector<1x64xf32> to vector<16x64xf32>
    %61 = arith.mulf %58, %60 : vector<16x64xf32>
    %cst_27 = arith.constant dense<0.000000e+00> : vector<16xf32>
    %62 = vector.multi_reduction <add>, %61, %cst_27 [1] : vector<16x64xf32> to vector<16xf32>
    %63 = vector.shape_cast %62 : vector<16xf32> to vector<16x1xf32>
    %c0_28 = arith.constant 0 : index
    %c0_29 = arith.constant 0 : index
    %64 = vector.load %arg7[%c0_28, %c0_29] : memref<1x1xf32, #tpu.memory_space<vmem>>, vector<1x1xf32>
    %65 = vector.broadcast %64 : vector<1x1xf32> to vector<16x1xf32>
    %66 = arith.addf %63, %65 : vector<16x1xf32>
    %67 = arith.negf %66 : vector<16x1xf32>
    %68 = math.exp %67 : vector<16x1xf32>
    %cst_30 = arith.constant 1.000000e+00 : f32
    %69 = vector.broadcast %cst_30 : f32 to vector<16x1xf32>
    %70 = arith.addf %69, %68 : vector<16x1xf32>
    %71 = arith.divf %69, %70 : vector<16x1xf32>
    %c0_31 = arith.constant 0 : index
    %c0_32 = arith.constant 0 : index
    %72 = vector.load %arg8[%c0_31, %c0_32] : memref<16x1xf32, #tpu.memory_space<vmem>>, vector<16x1xf32>
    tpu.vector_store %arg8[%c0_31, %c0_32], %71 {strides = array<i32>} : memref<16x1xf32, #tpu.memory_space<vmem>>, vector<16x1xf32>,
    return
  }
}

</mosaic_0001>

<llo_original>
// kernel: vanilla_rnn_forward.1
$region0: #{vanilla_rnn_forward.1}
  #allocation0 [shape = 'u32[]', space=smem, size = 0x4, offset = 0x4, fixed_abs, tag = 'smem constant byte address 0x4 - core index']
  #allocation1 [shape = 'u32[144,128]{1,0:T(1,128)}', space=vmem, size = 0x12000, scoped, tag = 'internal scratch']
  #allocation2 [shape = 'f32[1,1]{1,0:T(1,128)S(1)}', space=vmem, size = 0x200, scoped, tag = 'scoped memory for vanilla_rnn_forward.1']
  %s0 = inlined_call_operand.vmem [shape: f32[16,6], index: 0, kind: input, shape index: {}]
  %s1 = inlined_call_operand.vmem [shape: f32[6,64], index: 1, kind: input, shape index: {}]
  %s2 = inlined_call_operand.vmem [shape: bf16[64,64], index: 2, kind: input, shape index: {}]
  %s3 = inlined_call_operand.vmem [shape: f32[1,64], index: 3, kind: input, shape index: {}]
  %s4 = inlined_call_operand.vmem [shape: f32[64,64], index: 4, kind: input, shape index: {}]
  %s5 = inlined_call_operand.vmem [shape: f32[1,64], index: 5, kind: input, shape index: {}]
  %s6 = inlined_call_operand.vmem [shape: f32[1,64], index: 6, kind: input, shape index: {}]
  %s7 = inlined_call_operand.<no memory space> [shape: f32[1,1], index: 7, kind: input, shape index: {}]
  %s8 = inlined_call_operand.vmem [shape: f32[16,1], index: 8, kind: output, shape index: {0}]
  %s9 = inlined_call_operand.hbm [shape: f32[2,64], index: 9, kind: output, shape index: {1}]
  %10 = xla_tuple %s8, %s9
  %s11 = sld [smem:[#allocation0]]
  $region50: #{vanilla_rnn_forward.1} parent=0
    _
  %s13 = ssub.s32 1, %s11
  %s14 = scalar_select 0, %s13, %s11
  %v15 = vstv %s7
  %16 = vst [vmem:[#allocation2] sm:$0x1] %v15
  $region1: #{vanilla_rnn_forward.1} parent=0
    #allocation3 [shape = 'u8[1024]{0}', space=vmem, size = 0x400, scoped, tag = 'output window, operand 1, single buffered']
    #allocation4 [shape = 's32[1]{0}', space=sflag, size = 0x4, scoped, tag = 'scoped memory for vanilla_rnn_forward.1']
    %17 = vsyncpa [#allocation4], 0
    // Predicated region
    $region2: #{vanilla_rnn_forward.1} parent=1 // pred_check
      _
    $region3: #{vanilla_rnn_forward.1} parent=1 // pred_check_branch
      %19 = sbr.rel (0) target = $region5
    $region4: #{vanilla_rnn_forward.1} parent=1 // pred_region
      _
    $region5: #{vanilla_rnn_forward.1} parent=1 // pred_fallthru
      _
    // Predicated region
    $region6: #{vanilla_rnn_forward.1} parent=1 // pred_check
      _
    $region7: #{vanilla_rnn_forward.1} parent=1 // pred_check_branch
      %21 = sbr.rel (0) target = $region9
    $region8: #{vanilla_rnn_forward.1} parent=1 // pred_region
      _
    $region9: #{vanilla_rnn_forward.1} parent=1 // pred_fallthru
      _
    // Predicated region
    $region10: #{vanilla_rnn_forward.1} parent=1 // pred_check
      _
    $region11: #{vanilla_rnn_forward.1} parent=1 // pred_check_branch
      %23 = sbr.rel (0) target = $region13
    $region12: #{vanilla_rnn_forward.1} parent=1 // pred_region
      _
    $region13: #{vanilla_rnn_forward.1} parent=1 // pred_fallthru
      _
    // Predicated region
    $region14: #{vanilla_rnn_forward.1} parent=1 // pred_check
      _
    $region15: #{vanilla_rnn_forward.1} parent=1 // pred_check_branch
      %25 = sbr.rel (0) target = $region17
    $region16: #{vanilla_rnn_forward.1} parent=1 // pred_region
      _
    $region17: #{vanilla_rnn_forward.1} parent=1 // pred_fallthru
      _
    // Predicated region
    $region18: #{vanilla_rnn_forward.1} parent=1 // pred_check
      _
    $region19: #{vanilla_rnn_forward.1} parent=1 // pred_check_branch
      %27 = sbr.rel (0) target = $region21
    $region20: #{vanilla_rnn_forward.1} parent=1 // pred_region
      _
    $region21: #{vanilla_rnn_forward.1} parent=1 // pred_fallthru
      _
    // Predicated region
    $region22: #{vanilla_rnn_forward.1} parent=1 // pred_check
      _
    $region23: #{vanilla_rnn_forward.1} parent=1 // pred_check_branch
      %29 = sbr.rel (0) target = $region25
    $region24: #{vanilla_rnn_forward.1} parent=1 // pred_region
      _
    $region25: #{vanilla_rnn_forward.1} parent=1 // pred_fallthru
      _
    // Predicated region
    $region26: #{vanilla_rnn_forward.1} parent=1 // pred_check
      _
    $region27: #{vanilla_rnn_forward.1} parent=1 // pred_check_branch
      %31 = sbr.rel (0) target = $region29
    $region28: #{vanilla_rnn_forward.1} parent=1 // pred_region
      _
    $region29: #{vanilla_rnn_forward.1} parent=1 // pred_fallthru
      _
    // Predicated region
    $region30: #{vanilla_rnn_forward.1} parent=1 // pred_check
      _
    $region31: #{vanilla_rnn_forward.1} parent=1 // pred_check_branch
      %33 = sbr.rel (0) target = $region33
    $region32: #{vanilla_rnn_forward.1} parent=1 // pred_region
      _
    $region33: #{vanilla_rnn_forward.1} parent=1 // pred_fallthru
      _
    %v35 = vld [vmem:[%s0] sm:$0xff]
    %v36 = vld [vmem:[%s0 + $0x8] sm:$0xff]
    %v37 = vld [vmem:[%s1] sm:$0x3f]
    %v38 = vld [vmem:[%s3] sm:$0x1]
    %v40 = vlaneseq
    %v41 = vshrl.u32 %v40, 7
    %v42 = vsub.s32 0, %v41
    %v43 = vrot.slane %v38, %v42
    %vm45 = vcmask 48128
    %v47 = vsel %vm45, %v35, 0
    %v50 = vsel %vm45, %v36, 0
    %vm52 = vcmask 1045504
    %v54 = vsel %vm52, %v37, 0
    %56 = vmatprep.subr.mxu0 0.0
    %57 = vmatpush1.msra.mxu0 0.0
    %58 = vmatprep.subr.mxu0 0.0
    %59 = vmatpush1.msra.mxu0 0.0
    %60 = vmatprep.subr.mxu0 0.0
    %61 = vmatpush1.msra.mxu0 0.0
    %62 = vmatprep.subr.mxu0 0.0
    %63 = vmatpush1.msra.mxu0 0.0
    %64 = vmatprep.subr.mxu0 0.0
    %65 = vmatpush1.msra.mxu0 0.0
    %66 = vmatprep.subr.mxu0 0.0
    %67 = vmatpush1.msra.mxu0 0.0
    %68 = vmatprep.subr.mxu0 0.0
    %69 = vmatpush1.msra.mxu0 0.0
    %70 = vmatprep.subr.mxu0 0.0
    %71 = vmatpush1.msra.mxu0 0.0
    %72 = vmatprep.subr.mxu0 0.0
    %73 = vmatpush1.msra.mxu0 0.0
    %74 = vmatprep.subr.mxu0 0.0
    %75 = vmatpush1.msra.mxu0 0.0
    %76 = vmatprep.subr.mxu0 0.0
    %77 = vmatpush1.msra.mxu0 0.0
    %78 = vmatprep.subr.mxu0 0.0
    %79 = vmatpush1.msra.mxu0 0.0
    %80 = vmatprep.subr.mxu0 0.0
    %81 = vmatpush1.msra.mxu0 0.0
    %82 = vmatprep.subr.mxu0 0.0
    %83 = vmatpush1.msra.mxu0 0.0
    %84 = vmatprep.subr.mxu0 0.0
    %85 = vmatpush1.msra.mxu0 0.0
    %86 = vmatprep.subr.mxu0 0.0
    %87 = vmatpush1.msra.mxu0 %v54
    %88 = vmatprep.subr.mxu0 0.0
    %89 = vmatpush2.msra.mxu0 0.0
    %90 = vmatprep.subr.mxu0 0.0
    %91 = vmatpush2.msra.mxu0 0.0
    %92 = vmatprep.subr.mxu0 0.0
    %93 = vmatpush2.msra.mxu0 0.0
    %94 = vmatprep.subr.mxu0 0.0
    %95 = vmatpush2.msra.mxu0 0.0
    %96 = vmatprep.subr.mxu0 0.0
    %97 = vmatpush2.msra.mxu0 0.0
    %98 = vmatprep.subr.mxu0 0.0
    %99 = vmatpush2.msra.mxu0 0.0
    %100 = vmatprep.subr.mxu0 0.0
    %101 = vmatpush2.msra.mxu0 0.0
    %102 = vmatprep.subr.mxu0 0.0
    %103 = vmatpush2.msra.mxu0 0.0
    %104 = vmatprep.subr.mxu0 0.0
    %105 = vmatpush2.msra.mxu0 0.0
    %106 = vmatprep.subr.mxu0 0.0
    %107 = vmatpush2.msra.mxu0 0.0
    %108 = vmatprep.subr.mxu0 0.0
    %109 = vmatpush2.msra.mxu0 0.0
    %110 = vmatprep.subr.mxu0 0.0
    %111 = vmatpush2.msra.mxu0 0.0
    %112 = vmatprep.subr.mxu0 0.0
    %113 = vmatpush2.msra.mxu0 0.0
    %114 = vmatprep.subr.mxu0 0.0
    %115 = vmatpush2.msra.mxu0 0.0
    %116 = vmatprep.subr.mxu0 0.0
    %117 = vmatpush2.msra.mxu0 0.0
    %118 = vmatprep.subr.mxu0 0.0
    %119 = vmatpush2.msra.mxu0 0.0
    %120 = vmatprep.mubr.f32.mxu0 0.0
    %121 = vmatmul.mubr.f32.gmra.mxu0 %v47
    %v122 = vpop.f32.mrf.mxu0
    %v123 = vadd.f32 %v43, %v122
    %v124 = vpop.f32.mrf.mxu0
    %125 = vmatprep.mubr.f32.mxu0 0.0
    %126 = vmatmul.mubr.f32.gmra.mxu0 %v50
    %v127 = vpop.f32.mrf.mxu0
    %v128 = vadd.f32 %v43, %v127
    %v129 = vpop.f32.mrf.mxu0
    %130 = vdwg.mxu0
    %v131 = vld [vmem:[%s2] sm:$0xf]
    %v132 = vld [vmem:[%s2 + $0x4] sm:$0xf]
    %v133 = vld [vmem:[%s2 + $0x8] sm:$0xf]
    %v134 = vld [vmem:[%s2 + $0xc] sm:$0xf]
    %v135 = vld [vmem:[%s2 + $0x10] sm:$0xf]
    %v136 = vld [vmem:[%s2 + $0x14] sm:$0xf]
    %v137 = vld [vmem:[%s2 + $0x18] sm:$0xf]
    %v138 = vld [vmem:[%s2 + $0x1c] sm:$0xf]
    %v147 = vunpack.c.l.b16 %v131
    %v148 = vunpack.c.l.b16 %v132
    %v149 = vunpack.c.l.b16 %v133
    %v150 = vunpack.c.l.b16 %v134
    %v151 = vunpack.c.l.b16 %v135
    %v152 = vunpack.c.l.b16 %v136
    %v153 = vunpack.c.l.b16 %v137
    %v154 = vunpack.c.l.b16 %v138
    %v155 = vpack.c.b16 %v148, %v147
    %v156 = vpack.c.b16 %v150, %v149
    %v157 = vpack.c.b16 %v152, %v151
    %v158 = vpack.c.b16 %v154, %v153
    %vm163 = vcmask 523264
    %v165 = vsel %vm163, 0, 0
    %167 = vmatprep.subr.bf16.mxu0 0
    %168 = vmatpush1.bf16.msra.mxu0 0
    %169 = vmatprep.subr.bf16.mxu0 0
    %170 = vmatpush1.bf16.msra.mxu0 0
    %171 = vmatprep.subr.bf16.mxu0 0
    %172 = vmatpush1.bf16.msra.mxu0 0
    %173 = vmatprep.subr.bf16.mxu0 0
    %174 = vmatpush1.bf16.msra.mxu0 0
    %175 = vmatprep.subr.bf16.mxu0 0
    %176 = vmatpush1.bf16.msra.mxu0 %v158
    %177 = vmatprep.subr.bf16.mxu0 0
    %178 = vmatpush1.bf16.msra.mxu0 %v157
    %179 = vmatprep.subr.bf16.mxu0 0
    %180 = vmatpush1.bf16.msra.mxu0 %v156
    %181 = vmatprep.subr.bf16.mxu0 0
    %182 = vmatpush1.bf16.msra.mxu0 %v155
    %183 = vmatprep.subr.bf16.mxu0 0
    %184 = vmatpush2.bf16.msra.mxu0 0
    %185 = vmatprep.subr.bf16.mxu0 0
    %186 = vmatpush2.bf16.msra.mxu0 0
    %187 = vmatprep.subr.bf16.mxu0 0
    %188 = vmatpush2.bf16.msra.mxu0 0
    %189 = vmatprep.subr.bf16.mxu0 0
    %190 = vmatpush2.bf16.msra.mxu0 0
    %191 = vmatprep.subr.bf16.mxu0 0
    %192 = vmatpush2.bf16.msra.mxu0 0
    %193 = vmatprep.subr.bf16.mxu0 0
    %194 = vmatpush2.bf16.msra.mxu0 0
    %195 = vmatprep.subr.bf16.mxu0 0
    %196 = vmatpush2.bf16.msra.mxu0 0
    %197 = vmatprep.subr.bf16.mxu0 0
    %198 = vmatpush2.bf16.msra.mxu0 0
    %199 = vmatprep.mubr.bf16.mxu0 0
    %200 = vmatmul.mubr.bf16.gmra.mxu0 %v165
    %v201 = vpop.f32.mrf.mxu0
    %v202 = vadd.f32 0.0, %v201
    %v203 = vpop.f32.mrf.mxu0
    %v204 = vpop.f32.mrf.mxu0
    %v205 = vpop.f32.mrf.mxu0
    %206 = vdwg.mxu0
    %v207 = vadd.f32 %v123, %v202
    %v208 = vtanh.pop %v207
    %v209 = vpack.c.bf16 %v208, %v208
    %v211 = vsel %vm163, %v209, 0
    %213 = vmatprep.subr.bf16.mxu0 0
    %214 = vmatpush1.bf16.msra.mxu0 0
    %215 = vmatprep.subr.bf16.mxu0 0
    %216 = vmatpush1.bf16.msra.mxu0 0
    %217 = vmatprep.subr.bf16.mxu0 0
    %218 = vmatpush1.bf16.msra.mxu0 0
    %219 = vmatprep.subr.bf16.mxu0 0
    %220 = vmatpush1.bf16.msra.mxu0 0
    %221 = vmatprep.subr.bf16.mxu0 0
    %222 = vmatpush1.bf16.msra.mxu0 %v158
    %223 = vmatprep.subr.bf16.mxu0 0
    %224 = vmatpush1.bf16.msra.mxu0 %v157
    %225 = vmatprep.subr.bf16.mxu0 0
    %226 = vmatpush1.bf16.msra.mxu0 %v156
    %227 = vmatprep.subr.bf16.mxu0 0
    %228 = vmatpush1.bf16.msra.mxu0 %v155
    %229 = vmatprep.subr.bf16.mxu0 0
    %230 = vmatpush2.bf16.msra.mxu0 0
    %231 = vmatprep.subr.bf16.mxu0 0
    %232 = vmatpush2.bf16.msra.mxu0 0
    %233 = vmatprep.subr.bf16.mxu0 0
    %234 = vmatpush2.bf16.msra.mxu0 0
    %235 = vmatprep.subr.bf16.mxu0 0
    %236 = vmatpush2.bf16.msra.mxu0 0
    %237 = vmatprep.subr.bf16.mxu0 0
    %238 = vmatpush2.bf16.msra.mxu0 0
    %239 = vmatprep.subr.bf16.mxu0 0
    %240 = vmatpush2.bf16.msra.mxu0 0
    %241 = vmatprep.subr.bf16.mxu0 0
    %242 = vmatpush2.bf16.msra.mxu0 0
    %243 = vmatprep.subr.bf16.mxu0 0
    %244 = vmatpush2.bf16.msra.mxu0 0
    %245 = vmatprep.mubr.bf16.mxu0 0
    %246 = vmatmul.mubr.bf16.gmra.mxu0 %v211
    %v247 = vpop.f32.mrf.mxu0
    %v248 = vadd.f32 0.0, %v247
    %v249 = vpop.f32.mrf.mxu0
    %v250 = vpop.f32.mrf.mxu0
    %v251 = vpop.f32.mrf.mxu0
    %252 = vdwg.mxu0
    %v254 = vrot.slane %v248, 6
    %v256 = vadd.f32 %v123, %v254
    %v257 = vtanh.pop %v256
    %v258 = vpack.c.bf16 %v257, %v257
    %v260 = vrot.slane %v258, 1
    %v262 = vsel %vm163, %v260, 0
    %264 = vmatprep.subr.bf16.mxu0 0
    %265 = vmatpush1.bf16.msra.mxu0 0
    %266 = vmatprep.subr.bf16.mxu0 0
    %267 = vmatpush1.bf16.msra.mxu0 0
    %268 = vmatprep.subr.bf16.mxu0 0
    %269 = vmatpush1.bf16.msra.mxu0 0
    %270 = vmatprep.subr.bf16.mxu0 0
    %271 = vmatpush1.bf16.msra.mxu0 0
    %272 = vmatprep.subr.bf16.mxu0 0
    %273 = vmatpush1.bf16.msra.mxu0 %v158
    %274 = vmatprep.subr.bf16.mxu0 0
    %275 = vmatpush1.bf16.msra.mxu0 %v157
    %276 = vmatprep.subr.bf16.mxu0 0
    %277 = vmatpush1.bf16.msra.mxu0 %v156
    %278 = vmatprep.subr.bf16.mxu0 0
    %279 = vmatpush1.bf16.msra.mxu0 %v155
    %280 = vmatprep.subr.bf16.mxu0 0
    %281 = vmatpush2.bf16.msra.mxu0 0
    %282 = vmatprep.subr.bf16.mxu0 0
    %283 = vmatpush2.bf16.msra.mxu0 0
    %284 = vmatprep.subr.bf16.mxu0 0
    %285 = vmatpush2.bf16.msra.mxu0 0
    %286 = vmatprep.subr.bf16.mxu0 0
    %287 = vmatpush2.bf16.msra.mxu0 0
    %288 = vmatprep.subr.bf16.mxu0 0
    %289 = vmatpush2.bf16.msra.mxu0 0
    %290 = vmatprep.subr.bf16.mxu0 0
    %291 = vmatpush2.bf16.msra.mxu0 0
    %292 = vmatprep.subr.bf16.mxu0 0
    %293 = vmatpush2.bf16.msra.mxu0 0
    %294 = vmatprep.subr.bf16.mxu0 0
    %295 = vmatpush2.bf16.msra.mxu0 0
    %296 = vmatprep.mubr.bf16.mxu0 0
    %297 = vmatmul.mubr.bf16.gmra.mxu0 %v262
    %v298 = vpop.f32.mrf.mxu0
    %v299 = vadd.f32 0.0, %v298
    %v300 = vpop.f32.mrf.mxu0
    %v301 = vpop.f32.mrf.mxu0
    %v302 = vpop.f32.mrf.mxu0
    %303 = vdwg.mxu0
    %v305 = vrot.slane %v299, 4
    %v307 = vadd.f32 %v123, %v305
    %v308 = vtanh.pop %v307
    %v309 = vpack.c.bf16 %v308, %v308
    %v311 = vrot.slane %v309, 2
    %v313 = vsel %vm163, %v311, 0
    %315 = vmatprep.subr.bf16.mxu0 0
    %316 = vmatpush1.bf16.msra.mxu0 0
    %317 = vmatprep.subr.bf16.mxu0 0
    %318 = vmatpush1.bf16.msra.mxu0 0
    %319 = vmatprep.subr.bf16.mxu0 0
    %320 = vmatpush1.bf16.msra.mxu0 0
    %321 = vmatprep.subr.bf16.mxu0 0
    %322 = vmatpush1.bf16.msra.mxu0 0
    %323 = vmatprep.subr.bf16.mxu0 0
    %324 = vmatpush1.bf16.msra.mxu0 %v158
    %325 = vmatprep.subr.bf16.mxu0 0
    %326 = vmatpush1.bf16.msra.mxu0 %v157
    %327 = vmatprep.subr.bf16.mxu0 0
    %328 = vmatpush1.bf16.msra.mxu0 %v156
    %329 = vmatprep.subr.bf16.mxu0 0
    %330 = vmatpush1.bf16.msra.mxu0 %v155
    %331 = vmatprep.subr.bf16.mxu0 0
    %332 = vmatpush2.bf16.msra.mxu0 0
    %333 = vmatprep.subr.bf16.mxu0 0
    %334 = vmatpush2.bf16.msra.mxu0 0
    %335 = vmatprep.subr.bf16.mxu0 0
    %336 = vmatpush2.bf16.msra.mxu0 0
    %337 = vmatprep.subr.bf16.mxu0 0
    %338 = vmatpush2.bf16.msra.mxu0 0
    %339 = vmatprep.subr.bf16.mxu0 0
    %340 = vmatpush2.bf16.msra.mxu0 0
    %341 = vmatprep.subr.bf16.mxu0 0
    %342 = vmatpush2.bf16.msra.mxu0 0
    %343 = vmatprep.subr.bf16.mxu0 0
    %344 = vmatpush2.bf16.msra.mxu0 0
    %345 = vmatprep.subr.bf16.mxu0 0
    %346 = vmatpush2.bf16.msra.mxu0 0
    %347 = vmatprep.mubr.bf16.mxu0 0
    %348 = vmatmul.mubr.bf16.gmra.mxu0 %v313
    %v349 = vpop.f32.mrf.mxu0
    %v350 = vadd.f32 0.0, %v349
    %v351 = vpop.f32.mrf.mxu0
    %v352 = vpop.f32.mrf.mxu0
    %v353 = vpop.f32.mrf.mxu0
    %354 = vdwg.mxu0
    %v356 = vrot.slane %v350, 2
    %v358 = vadd.f32 %v123, %v356
    %v359 = vtanh.pop %v358
    %v360 = vpack.c.bf16 %v359, %v359
    %v362 = vrot.slane %v360, 3
    %v364 = vsel %vm163, %v362, 0
    %366 = vmatprep.subr.bf16.mxu0 0
    %367 = vmatpush1.bf16.msra.mxu0 0
    %368 = vmatprep.subr.bf16.mxu0 0
    %369 = vmatpush1.bf16.msra.mxu0 0
    %370 = vmatprep.subr.bf16.mxu0 0
    %371 = vmatpush1.bf16.msra.mxu0 0
    %372 = vmatprep.subr.bf16.mxu0 0
    %373 = vmatpush1.bf16.msra.mxu0 0
    %374 = vmatprep.subr.bf16.mxu0 0
    %375 = vmatpush1.bf16.msra.mxu0 %v158
    %376 = vmatprep.subr.bf16.mxu0 0
    %377 = vmatpush1.bf16.msra.mxu0 %v157
    %378 = vmatprep.subr.bf16.mxu0 0
    %379 = vmatpush1.bf16.msra.mxu0 %v156
    %380 = vmatprep.subr.bf16.mxu0 0
    %381 = vmatpush1.bf16.msra.mxu0 %v155
    %382 = vmatprep.subr.bf16.mxu0 0
    %383 = vmatpush2.bf16.msra.mxu0 0
    %384 = vmatprep.subr.bf16.mxu0 0
    %385 = vmatpush2.bf16.msra.mxu0 0
    %386 = vmatprep.subr.bf16.mxu0 0
    %387 = vmatpush2.bf16.msra.mxu0 0
    %388 = vmatprep.subr.bf16.mxu0 0
    %389 = vmatpush2.bf16.msra.mxu0 0
    %390 = vmatprep.subr.bf16.mxu0 0
    %391 = vmatpush2.bf16.msra.mxu0 0
    %392 = vmatprep.subr.bf16.mxu0 0
    %393 = vmatpush2.bf16.msra.mxu0 0
    %394 = vmatprep.subr.bf16.mxu0 0
    %395 = vmatpush2.bf16.msra.mxu0 0
    %396 = vmatprep.subr.bf16.mxu0 0
    %397 = vmatpush2.bf16.msra.mxu0 0
    %398 = vmatprep.mubr.bf16.mxu0 0
    %399 = vmatmul.mubr.bf16.gmra.mxu0 %v364
    %v400 = vpop.f32.mrf.mxu0
    %v401 = vadd.f32 0.0, %v400
    %v402 = vpop.f32.mrf.mxu0
    %v403 = vpop.f32.mrf.mxu0
    %v404 = vpop.f32.mrf.mxu0
    %405 = vdwg.mxu0
    %v406 = vadd.f32 %v128, %v401
    %v407 = vtanh.pop %v406
    %v408 = vpack.c.bf16 %v407, %v407
    %v410 = vsel %vm163, %v408, 0
    %412 = vmatprep.subr.bf16.mxu0 0
    %413 = vmatpush1.bf16.msra.mxu0 0
    %414 = vmatprep.subr.bf16.mxu0 0
    %415 = vmatpush1.bf16.msra.mxu0 0
    %416 = vmatprep.subr.bf16.mxu0 0
    %417 = vmatpush1.bf16.msra.mxu0 0
    %418 = vmatprep.subr.bf16.mxu0 0
    %419 = vmatpush1.bf16.msra.mxu0 0
    %420 = vmatprep.subr.bf16.mxu0 0
    %421 = vmatpush1.bf16.msra.mxu0 %v158
    %422 = vmatprep.subr.bf16.mxu0 0
    %423 = vmatpush1.bf16.msra.mxu0 %v157
    %424 = vmatprep.subr.bf16.mxu0 0
    %425 = vmatpush1.bf16.msra.mxu0 %v156
    %426 = vmatprep.subr.bf16.mxu0 0
    %427 = vmatpush1.bf16.msra.mxu0 %v155
    %428 = vmatprep.subr.bf16.mxu0 0
    %429 = vmatpush2.bf16.msra.mxu0 0
    %430 = vmatprep.subr.bf16.mxu0 0
    %431 = vmatpush2.bf16.msra.mxu0 0
    %432 = vmatprep.subr.bf16.mxu0 0
    %433 = vmatpush2.bf16.msra.mxu0 0
    %434 = vmatprep.subr.bf16.mxu0 0
    %435 = vmatpush2.bf16.msra.mxu0 0
    %436 = vmatprep.subr.bf16.mxu0 0
    %437 = vmatpush2.bf16.msra.mxu0 0
    %438 = vmatprep.subr.bf16.mxu0 0
    %439 = vmatpush2.bf16.msra.mxu0 0
    %440 = vmatprep.subr.bf16.mxu0 0
    %441 = vmatpush2.bf16.msra.mxu0 0
    %442 = vmatprep.subr.bf16.mxu0 0
    %443 = vmatpush2.bf16.msra.mxu0 0
    %444 = vmatprep.mubr.bf16.mxu0 0
    %445 = vmatmul.mubr.bf16.gmra.mxu0 %v410
    %v446 = vpop.f32.mrf.mxu0
    %v447 = vadd.f32 0.0, %v446
    %v448 = vpop.f32.mrf.mxu0
    %v449 = vpop.f32.mrf.mxu0
    %v450 = vpop.f32.mrf.mxu0
    %451 = vdwg.mxu0
    %v453 = vrot.slane %v447, 6
    %v455 = vadd.f32 %v128, %v453
    %v456 = vtanh.pop %v455
    %v457 = vpack.c.bf16 %v456, %v456
    %v459 = vrot.slane %v457, 1
    %v461 = vsel %vm163, %v459, 0
    %463 = vmatprep.subr.bf16.mxu0 0
    %464 = vmatpush1.bf16.msra.mxu0 0
    %465 = vmatprep.subr.bf16.mxu0 0
    %466 = vmatpush1.bf16.msra.mxu0 0
    %467 = vmatprep.subr.bf16.mxu0 0
    %468 = vmatpush1.bf16.msra.mxu0 0
    %469 = vmatprep.subr.bf16.mxu0 0
    %470 = vmatpush1.bf16.msra.mxu0 0
    %471 = vmatprep.subr.bf16.mxu0 0
    %472 = vmatpush1.bf16.msra.mxu0 %v158
    %473 = vmatprep.subr.bf16.mxu0 0
    %474 = vmatpush1.bf16.msra.mxu0 %v157
    %475 = vmatprep.subr.bf16.mxu0 0
    %476 = vmatpush1.bf16.msra.mxu0 %v156
    %477 = vmatprep.subr.bf16.mxu0 0
    %478 = vmatpush1.bf16.msra.mxu0 %v155
    %479 = vmatprep.subr.bf16.mxu0 0
    %480 = vmatpush2.bf16.msra.mxu0 0
    %481 = vmatprep.subr.bf16.mxu0 0
    %482 = vmatpush2.bf16.msra.mxu0 0
    %483 = vmatprep.subr.bf16.mxu0 0
    %484 = vmatpush2.bf16.msra.mxu0 0
    %485 = vmatprep.subr.bf16.mxu0 0
    %486 = vmatpush2.bf16.msra.mxu0 0
    %487 = vmatprep.subr.bf16.mxu0 0
    %488 = vmatpush2.bf16.msra.mxu0 0
    %489 = vmatprep.subr.bf16.mxu0 0
    %490 = vmatpush2.bf16.msra.mxu0 0
    %491 = vmatprep.subr.bf16.mxu0 0
    %492 = vmatpush2.bf16.msra.mxu0 0
    %493 = vmatprep.subr.bf16.mxu0 0
    %494 = vmatpush2.bf16.msra.mxu0 0
    %495 = vmatprep.mubr.bf16.mxu0 0
    %496 = vmatmul.mubr.bf16.gmra.mxu0 %v461
    %v497 = vpop.f32.mrf.mxu0
    %v498 = vadd.f32 0.0, %v497
    %v499 = vpop.f32.mrf.mxu0
    %v500 = vpop.f32.mrf.mxu0
    %v501 = vpop.f32.mrf.mxu0
    %502 = vdwg.mxu0
    %v504 = vrot.slane %v498, 4
    %v506 = vadd.f32 %v128, %v504
    %v507 = vtanh.pop %v506
    %v508 = vpack.c.bf16 %v507, %v507
    %v510 = vrot.slane %v508, 2
    %v512 = vsel %vm163, %v510, 0
    %514 = vmatprep.subr.bf16.mxu0 0
    %515 = vmatpush1.bf16.msra.mxu0 0
    %516 = vmatprep.subr.bf16.mxu0 0
    %517 = vmatpush1.bf16.msra.mxu0 0
    %518 = vmatprep.subr.bf16.mxu0 0
    %519 = vmatpush1.bf16.msra.mxu0 0
    %520 = vmatprep.subr.bf16.mxu0 0
    %521 = vmatpush1.bf16.msra.mxu0 0
    %522 = vmatprep.subr.bf16.mxu0 0
    %523 = vmatpush1.bf16.msra.mxu0 %v158
    %524 = vmatprep.subr.bf16.mxu0 0
    %525 = vmatpush1.bf16.msra.mxu0 %v157
    %526 = vmatprep.subr.bf16.mxu0 0
    %527 = vmatpush1.bf16.msra.mxu0 %v156
    %528 = vmatprep.subr.bf16.mxu0 0
    %529 = vmatpush1.bf16.msra.mxu0 %v155
    %530 = vmatprep.subr.bf16.mxu0 0
    %531 = vmatpush2.bf16.msra.mxu0 0
    %532 = vmatprep.subr.bf16.mxu0 0
    %533 = vmatpush2.bf16.msra.mxu0 0
    %534 = vmatprep.subr.bf16.mxu0 0
    %535 = vmatpush2.bf16.msra.mxu0 0
    %536 = vmatprep.subr.bf16.mxu0 0
    %537 = vmatpush2.bf16.msra.mxu0 0
    %538 = vmatprep.subr.bf16.mxu0 0
    %539 = vmatpush2.bf16.msra.mxu0 0
    %540 = vmatprep.subr.bf16.mxu0 0
    %541 = vmatpush2.bf16.msra.mxu0 0
    %542 = vmatprep.subr.bf16.mxu0 0
    %543 = vmatpush2.bf16.msra.mxu0 0
    %544 = vmatprep.subr.bf16.mxu0 0
    %545 = vmatpush2.bf16.msra.mxu0 0
    %546 = vmatprep.mubr.bf16.mxu0 0
    %547 = vmatmul.mubr.bf16.gmra.mxu0 %v512
    %v548 = vpop.f32.mrf.mxu0
    %v549 = vadd.f32 0.0, %v548
    %v550 = vpop.f32.mrf.mxu0
    %v551 = vpop.f32.mrf.mxu0
    %v552 = vpop.f32.mrf.mxu0
    %553 = vdwg.mxu0
    %v555 = vrot.slane %v549, 2
    %v557 = vadd.f32 %v128, %v555
    %v558 = vtanh.pop %v557
    %vm559 = vcmask 523270
    %560 = vst.msk [vmem:[#allocation3 - $0x6] sm:$0xc0] %vm559, %v558
    %vm561 = vcmask 1041408
    %v562 = vsel %vm561, %v208, %v257
    %vm563 = vcmask 1043456
    %v564 = vsel %vm563, %v562, %v308
    %v565 = vsel %vm52, %v564, %v359
    %v566 = vsel %vm561, %v407, %v456
    %v567 = vsel %vm563, %v566, %v507
    %v568 = vsel %vm52, %v567, %v558
    %v569 = vmax.f32 %v565, 0.0
    %v570 = vmax.f32 %v568, 0.0
    %v571 = vld [vmem:[%s4] sm:$0xff]
    %v572 = vld [vmem:[%s4 + $0x8] sm:$0xff]
    %v573 = vld [vmem:[%s4 + $0x10] sm:$0xff]
    %v574 = vld [vmem:[%s4 + $0x18] sm:$0xff]
    %v575 = vld [vmem:[%s4 + $0x20] sm:$0xff]
    %v576 = vld [vmem:[%s4 + $0x28] sm:$0xff]
    %v577 = vld [vmem:[%s4 + $0x30] sm:$0xff]
    %v578 = vld [vmem:[%s4 + $0x38] sm:$0xff]
    %v579 = vld [vmem:[%s5] sm:$0x1]
    %v581 = vlaneseq
    %v582 = vshrl.u32 %v581, 7
    %v583 = vsub.s32 0, %v582
    %v584 = vrot.slane %v579, %v583
    %v587 = vsel %vm163, %v569, 0
    %v590 = vsel %vm163, %v570, 0
    %592 = vmatprep.subr.mxu0 0.0
    %593 = vmatpush1.msra.mxu0 0.0
    %594 = vmatprep.subr.mxu0 0.0
    %595 = vmatpush1.msra.mxu0 0.0
    %596 = vmatprep.subr.mxu0 0.0
    %597 = vmatpush1.msra.mxu0 0.0
    %598 = vmatprep.subr.mxu0 0.0
    %599 = vmatpush1.msra.mxu0 0.0
    %600 = vmatprep.subr.mxu0 0.0
    %601 = vmatpush1.msra.mxu0 0.0
    %602 = vmatprep.subr.mxu0 0.0
    %603 = vmatpush1.msra.mxu0 0.0
    %604 = vmatprep.subr.mxu0 0.0
    %605 = vmatpush1.msra.mxu0 0.0
    %606 = vmatprep.subr.mxu0 0.0
    %607 = vmatpush1.msra.mxu0 0.0
    %608 = vmatprep.subr.mxu0 0.0
    %609 = vmatpush1.msra.mxu0 %v578
    %610 = vmatprep.subr.mxu0 0.0
    %611 = vmatpush1.msra.mxu0 %v577
    %612 = vmatprep.subr.mxu0 0.0
    %613 = vmatpush1.msra.mxu0 %v576
    %614 = vmatprep.subr.mxu0 0.0
    %615 = vmatpush1.msra.mxu0 %v575
    %616 = vmatprep.subr.mxu0 0.0
    %617 = vmatpush1.msra.mxu0 %v574
    %618 = vmatprep.subr.mxu0 0.0
    %619 = vmatpush1.msra.mxu0 %v573
    %620 = vmatprep.subr.mxu0 0.0
    %621 = vmatpush1.msra.mxu0 %v572
    %622 = vmatprep.subr.mxu0 0.0
    %623 = vmatpush1.msra.mxu0 %v571
    %624 = vmatprep.subr.mxu0 0.0
    %625 = vmatpush2.msra.mxu0 0.0
    %626 = vmatprep.subr.mxu0 0.0
    %627 = vmatpush2.msra.mxu0 0.0
    %628 = vmatprep.subr.mxu0 0.0
    %629 = vmatpush2.msra.mxu0 0.0
    %630 = vmatprep.subr.mxu0 0.0
    %631 = vmatpush2.msra.mxu0 0.0
    %632 = vmatprep.subr.mxu0 0.0
    %633 = vmatpush2.msra.mxu0 0.0
    %634 = vmatprep.subr.mxu0 0.0
    %635 = vmatpush2.msra.mxu0 0.0
    %636 = vmatprep.subr.mxu0 0.0
    %637 = vmatpush2.msra.mxu0 0.0
    %638 = vmatprep.subr.mxu0 0.0
    %639 = vmatpush2.msra.mxu0 0.0
    %640 = vmatprep.subr.mxu0 0.0
    %641 = vmatpush2.msra.mxu0 0.0
    %642 = vmatprep.subr.mxu0 0.0
    %643 = vmatpush2.msra.mxu0 0.0
    %644 = vmatprep.subr.mxu0 0.0
    %645 = vmatpush2.msra.mxu0 0.0
    %646 = vmatprep.subr.mxu0 0.0
    %647 = vmatpush2.msra.mxu0 0.0
    %648 = vmatprep.subr.mxu0 0.0
    %649 = vmatpush2.msra.mxu0 0.0
    %650 = vmatprep.subr.mxu0 0.0
    %651 = vmatpush2.msra.mxu0 0.0
    %652 = vmatprep.subr.mxu0 0.0
    %653 = vmatpush2.msra.mxu0 0.0
    %654 = vmatprep.subr.mxu0 0.0
    %655 = vmatpush2.msra.mxu0 0.0
    %656 = vmatprep.mubr.f32.mxu0 0.0
    %657 = vmatmul.mubr.f32.gmra.mxu0 %v587
    %v658 = vpop.f32.mrf.mxu0
    %v659 = vadd.f32 %v584, %v658
    %v660 = vpop.f32.mrf.mxu0
    %661 = vmatprep.mubr.f32.mxu0 0.0
    %662 = vmatmul.mubr.f32.gmra.mxu0 %v590
    %v663 = vpop.f32.mrf.mxu0
    %v664 = vadd.f32 %v584, %v663
    %v665 = vpop.f32.mrf.mxu0
    %666 = vdwg.mxu0
    %v667 = vmax.f32 %v659, 0.0
    %v668 = vmax.f32 %v664, 0.0
    %v669 = vld [vmem:[%s6] sm:$0x1]
    %v671 = vlaneseq
    %v672 = vshrl.u32 %v671, 7
    %v673 = vsub.s32 0, %v672
    %v674 = vrot.slane %v669, %v673
    %v676 = vmul.f32 %v667, %v674
    %v677 = vmul.f32 %v668, %v674
    %v678 = vsel %vm163, %v676, 0.0
    %679 = vadd.xlane.f32.xlu0 %v678
    %v680 = vpop.xlane.xlu0 %679
    %v681 = vsel %vm163, %v677, 0.0
    %682 = vadd.xlane.f32.xlu0 %v681
    %v683 = vpop.xlane.xlu0 %682
    %v684 = vld [vmem:[#allocation2] sm:$0x1]
    %v686 = vlaneseq
    %v687 = vshrl.u32 %v686, 7
    %v688 = vsub.s32 0, %v687
    %v689 = vrot.slane %v684, %v688
    %v691 = vadd.f32 %v680, %v689
    %v692 = vadd.f32 %v683, %v689
    %v693 = vxor.u32 %v691, 2147483648
    %v694 = vxor.u32 %v692, 2147483648
    %v695 = vmul.f32 %v693, 1.442695
    %v696 = vpow.pop %v695
    %v697 = vmul.f32 %v694, 1.442695
    %v698 = vpow.pop %v697
    %v699 = vadd.f32 %v696, 1.0
    %v700 = vadd.f32 %v698, 1.0
    %v701 = vrcp.pop %v699
    %v702 = vmul.f32 1.0, %v701
    %v703 = vrcp.pop %v700
    %v704 = vmul.f32 1.0, %v703
    %vm705 = vcmask 7168
    %706 = vst.msk [vmem:[%s8] sm:$0xff] %vm705, %v702
    %707 = vst.msk [vmem:[%s8 + $0x8] sm:$0xff] %vm705, %v704
    // Predicated region
    $region34: #{vanilla_rnn_forward.1} parent=1 // pred_check
      _
    $region35: #{vanilla_rnn_forward.1} parent=1 // pred_check_branch
      %709 = sbr.rel (0) target = $region37
    $region36: #{vanilla_rnn_forward.1} parent=1 // pred_region
      _
    $region37: #{vanilla_rnn_forward.1} parent=1 // pred_fallthru
      _
    // Predicated region
    $region38: #{vanilla_rnn_forward.1} parent=1 // pred_check
      _
    $region39: #{vanilla_rnn_forward.1} parent=1 // pred_check_branch
      %711 = sbr.rel (0) target = $region41
    $region40: #{vanilla_rnn_forward.1} parent=1 // pred_region
      %s713 = ssub.s32 32, 32
      %714 = vsyncadd [#allocation4], %s713
      %s716 = sshll.u32 [#allocation3], 4
      %s717 = int_to_ptr.vmem [resolvable:$true] %s716
      %719 = dma.vmem_to_hbm [thread:$0]  %s717, 32, %s9, [#allocation4]
    $region41: #{vanilla_rnn_forward.1} parent=1 // pred_fallthru
      _
    // Predicated region
    $region42: #{vanilla_rnn_forward.1} parent=1 // pred_check
      _
    $region43: #{vanilla_rnn_forward.1} parent=1 // pred_check_branch
      %721 = sbr.rel (0) target = $region45
    $region44: #{vanilla_rnn_forward.1} parent=1 // pred_region
      _
    $region45: #{vanilla_rnn_forward.1} parent=1 // pred_fallthru
      _
    // Predicated region
    $region46: #{vanilla_rnn_forward.1} parent=1 // pred_check
      _
    $region47: #{vanilla_rnn_forward.1} parent=1 // pred_check_branch
      %723 = sbr.rel (0) target = $region49
    $region48: #{vanilla_rnn_forward.1} parent=1 // pred_region
      %724 = dma.done [#allocation4], 32
    $region49: #{vanilla_rnn_forward.1} parent=1 // pred_fallthru
      _
    %725 = vsyncpa [#allocation4], 1

</llo_original>
